<compile_context>
chip_gen: v7x
topology: tpu7x:2x2x1
jax: 0.10.0
libtpu: 0.0.40
codegen_flags: <defaults>
</compile_context>

<pallas_src>
import functools

import jax
import jax.numpy as jnp
import numpy as np
from jax.experimental import pallas as pl
from jax.experimental.pallas import tpu as pltpu


def _make_tap_masks_np(H, W):
    """(9, H*W) f32 {0,1}: mask[t, p] == 0 where tap t at flattened position p reads padding."""
    pos = np.arange(H * W)
    h = pos // W
    w = pos % W
    masks = np.empty((9, H * W), np.float32)
    for t in range(9):
        kh, kw = divmod(t, 3)
        ok = (h + kh - 1 >= 0) & (h + kh - 1 < H) & (w + kw - 1 >= 0) & (w + kw - 1 < W)
        masks[t] = ok.astype(np.float32)
    return masks


def _pack_weights(w_oihw, bias, N, C):
    """OIHW conv weights + bias -> (N*C, 9*N*C + 1) batch-block-diagonal matmul weights.

    Column t*N*C + n'*C + cin of output row n*C + cout holds w[cout, cin, kh, kw] for tap
    t = kh*3 + kw when n' == n (zero otherwise); the final column holds the bias (it multiplies
    the ones row appended to the stacked tap activations inside the kernel).
    """
    w = w_oihw.astype(jnp.float32)
    eye_n = jnp.eye(N, dtype=jnp.float32)
    blocks = [jnp.kron(eye_n, w[:, :, t // 3, t % 3]) for t in range(9)]   # 9 x (N*C, N*C)
    bcol = jnp.tile(bias.astype(jnp.float32), N)[:, None]                  # (N*C, 1)
    return jnp.concatenate(blocks + [bcol], axis=1)                        # (N*C, 9*N*C + 1)


def _residual_block_kernel(mask_ref, x_ref, w0_ref, w1_ref, o_ref, *, H, W):
    HW = H * W
    x = x_ref[...]                                    # (N*C, HW); kept for the residual add
    ones_row = jnp.ones((1, HW), dtype=jnp.float32)   # bias row of the stacked activations

    def conv3x3(a, w_ref):
        # 3x3 same-padding conv of a (N*C, HW) activation:
        #   - each tap is a lane roll (XLU) of the full tile, zeroed at the image border by a
        #     precomputed mask (VPU); rows are independent so the batch-in-sublanes fold is exact,
        #   - the 9 taps + ones row (all full-sublane tiles) are stacked without relayout and the
        #     whole channel mix + bias is a single f32 MXU matmul vs block-diagonal weights.
        taps = []
        for t in range(9):
            kh, kw = divmod(t, 3)
            off = (kh - 1) * W + (kw - 1)             # source offset in the flattened H*W axis
            s = a if off == 0 else pltpu.roll(a, (-off) % HW, axis=1)
            if t != 4:                                # centre tap never reads padding
                s = s * mask_ref[t:t + 1, :]
            taps.append(s)
        taps.append(ones_row)
        stacked = jnp.concatenate(taps, axis=0)       # (9*N*C + 1, HW)
        return jnp.dot(w_ref[...], stacked, preferred_element_type=jnp.float32)

    a0 = jnp.maximum(x, 0.0)                          # relu
    y0 = conv3x3(a0, w0_ref)                          # conv0 (+ b0)
    a1 = jnp.maximum(y0, 0.0)                         # relu
    y1 = conv3x3(a1, w1_ref)                          # conv1 (+ b1)
    o_ref[...] = y1 + x                               # residual add (pre-relu input)


def residual_block_pallas(x_nchw, w0_oihw, b0, w1_oihw, b1):
    """Fused ResidualBlock forward.  Accepts / returns NCHW like PyTorch."""
    x = x_nchw.astype(jnp.float32)
    N, C, H, W = x.shape
    HW = H * W
    NC = N * C

    x_flat = x.reshape(NC, HW)                        # contiguous reshape, lane-dense H*W
    masks = jnp.asarray(_make_tap_masks_np(H, W))     # hoisted out of the kernel
    w0p = _pack_weights(w0_oihw, b0, N, C)            # (NC, 9*NC + 1), bias folded in
    w1p = _pack_weights(w1_oihw, b1, N, C)

    kernel = functools.partial(_residual_block_kernel, H=H, W=W)

    out_flat = pl.pallas_call(
        kernel,
        out_shape=jax.ShapeDtypeStruct((NC, HW), jnp.float32),
        in_specs=[
            pl.BlockSpec(memory_space=pltpu.MemorySpace.VMEM),   # masks (9, HW)
            pl.BlockSpec(memory_space=pltpu.MemorySpace.VMEM),   # x     (NC, HW)
            pl.BlockSpec(memory_space=pltpu.MemorySpace.VMEM),   # w0    (NC, 9*NC + 1)
            pl.BlockSpec(memory_space=pltpu.MemorySpace.VMEM),   # w1    (NC, 9*NC + 1)
        ],
        out_specs=pl.BlockSpec(memory_space=pltpu.MemorySpace.VMEM),
    )(masks, x_flat, w0p, w1p)

    return out_flat.reshape(N, C, H, W)


def residual_block_ref(x_nchw, w0_oihw, b0, w1_oihw, b1):
    """Pure-JAX reference matching the PyTorch forward exactly (NCHW)."""
    def conv(x, w, b):
        y = jax.lax.conv_general_dilated(
            x, w, window_strides=(1, 1), padding=((1, 1), (1, 1)),
            dimension_numbers=('NCHW', 'OIHW', 'NCHW'),
            precision=jax.lax.Precision.HIGHEST)
        return y + b[None, :, None, None]

    h = jax.nn.relu(x_nchw)
    h = conv(h, w0_oihw, b0)
    h = jax.nn.relu(h)
    h = conv(h, w1_oihw, b1)
    return h + x_nchw


if __name__ == "__main__":
    # small shapes consistent with the module: batch=2, channels=4, spatial=16
    N, C, H, W = 2, 4, 16, 16

    key = jax.random.PRNGKey(0)
    kx, kw0, kb0, kw1, kb1 = jax.random.split(key, 5)

    x = jax.random.normal(kx, (N, C, H, W), jnp.float32)

    # deterministic init, same shapes as nn.Conv2d(C, C, 3) params, kaiming-uniform-ish bound
    fan_in = C * 3 * 3
    bound = 1.0 / np.sqrt(fan_in)
    w0 = jax.random.uniform(kw0, (C, C, 3, 3), jnp.float32, -bound, bound)
    b0 = jax.random.uniform(kb0, (C,), jnp.float32, -bound, bound)
    w1 = jax.random.uniform(kw1, (C, C, 3, 3), jnp.float32, -bound, bound)
    b1 = jax.random.uniform(kb1, (C,), jnp.float32, -bound, bound)

    out = residual_block_pallas(x, w0, b0, w1, b1)
    out = jax.block_until_ready(out)

    ref = residual_block_ref(x, w0, b0, w1, b1)
    np.testing.assert_allclose(np.asarray(out), np.asarray(ref), atol=1e-4, rtol=1e-4)

    print("KERNEL_OK")
</pallas_src>

<mosaic_0001>
module attributes {stable_mosaic.version = 11 : i64} {
  func.func @_residual_block_kernel(%arg0: memref<9x256xf32, #tpu.memory_space<vmem>>, %arg1: memref<8x256xf32, #tpu.memory_space<vmem>>, %arg2: memref<8x73xf32, #tpu.memory_space<vmem>>, %arg3: memref<8x73xf32, #tpu.memory_space<vmem>>, %arg4: memref<8x256xf32, #tpu.memory_space<vmem>>) attributes {dimension_semantics = [], scalar_prefetch = 0 : i64, scratch_operands = 0 : i64, tpu.core_type = #tpu.core_type<tc>} {
    %c0 = arith.constant 0 : index
    %c0_0 = arith.constant 0 : index
    %0 = vector.load %arg1[%c0, %c0_0] : memref<8x256xf32, #tpu.memory_space<vmem>>, vector<8x256xf32>
    %cst = arith.constant 1.000000e+00 : f32
    %1 = vector.broadcast %cst : f32 to vector<1x256xf32>
    %cst_1 = arith.constant 0.000000e+00 : f32
    %2 = vector.broadcast %cst_1 : f32 to vector<8x256xf32>
    %3 = arith.maximumf %0, %2 : vector<8x256xf32>
    %c17_i32 = arith.constant 17 : i32
    %4 = tpu.dynamic_rotate %3 by %c17_i32 dim 1 : vector<8x256xf32>, i32 -> vector<8x256xf32>
    %c0_2 = arith.constant 0 : index
    %c0_3 = arith.constant 0 : index
    %5 = vector.load %arg0[%c0_2, %c0_3] : memref<9x256xf32, #tpu.memory_space<vmem>>, vector<1x256xf32>
    %6 = vector.broadcast %5 : vector<1x256xf32> to vector<8x256xf32>
    %7 = arith.mulf %4, %6 : vector<8x256xf32>
    %c16_i32 = arith.constant 16 : i32
    %8 = tpu.dynamic_rotate %3 by %c16_i32 dim 1 : vector<8x256xf32>, i32 -> vector<8x256xf32>
    %c1 = arith.constant 1 : index
    %c0_4 = arith.constant 0 : index
    %9 = vector.load %arg0[%c1, %c0_4] : memref<9x256xf32, #tpu.memory_space<vmem>>, vector<1x256xf32>
    %10 = vector.broadcast %9 : vector<1x256xf32> to vector<8x256xf32>
    %11 = arith.mulf %8, %10 : vector<8x256xf32>
    %c15_i32 = arith.constant 15 : i32
    %12 = tpu.dynamic_rotate %3 by %c15_i32 dim 1 : vector<8x256xf32>, i32 -> vector<8x256xf32>
    %c2 = arith.constant 2 : index
    %c0_5 = arith.constant 0 : index
    %13 = vector.load %arg0[%c2, %c0_5] : memref<9x256xf32, #tpu.memory_space<vmem>>, vector<1x256xf32>
    %14 = vector.broadcast %13 : vector<1x256xf32> to vector<8x256xf32>
    %15 = arith.mulf %12, %14 : vector<8x256xf32>
    %c1_i32 = arith.constant 1 : i32
    %16 = tpu.dynamic_rotate %3 by %c1_i32 dim 1 : vector<8x256xf32>, i32 -> vector<8x256xf32>
    %c3 = arith.constant 3 : index
    %c0_6 = arith.constant 0 : index
    %17 = vector.load %arg0[%c3, %c0_6] : memref<9x256xf32, #tpu.memory_space<vmem>>, vector<1x256xf32>
    %18 = vector.broadcast %17 : vector<1x256xf32> to vector<8x256xf32>
    %19 = arith.mulf %16, %18 : vector<8x256xf32>
    %c255_i32 = arith.constant 255 : i32
    %20 = tpu.dynamic_rotate %3 by %c255_i32 dim 1 : vector<8x256xf32>, i32 -> vector<8x256xf32>
    %c5 = arith.constant 5 : index
    %c0_7 = arith.constant 0 : index
    %21 = vector.load %arg0[%c5, %c0_7] : memref<9x256xf32, #tpu.memory_space<vmem>>, vector<1x256xf32>
    %22 = vector.broadcast %21 : vector<1x256xf32> to vector<8x256xf32>
    %23 = arith.mulf %20, %22 : vector<8x256xf32>
    %c241_i32 = arith.constant 241 : i32
    %24 = tpu.dynamic_rotate %3 by %c241_i32 dim 1 : vector<8x256xf32>, i32 -> vector<8x256xf32>
    %c6 = arith.constant 6 : index
    %c0_8 = arith.constant 0 : index
    %25 = vector.load %arg0[%c6, %c0_8] : memref<9x256xf32, #tpu.memory_space<vmem>>, vector<1x256xf32>
    %26 = vector.broadcast %25 : vector<1x256xf32> to vector<8x256xf32>
    %27 = arith.mulf %24, %26 : vector<8x256xf32>
    %c240_i32 = arith.constant 240 : i32
    %28 = tpu.dynamic_rotate %3 by %c240_i32 dim 1 : vector<8x256xf32>, i32 -> vector<8x256xf32>
    %c7 = arith.constant 7 : index
    %c0_9 = arith.constant 0 : index
    %29 = vector.load %arg0[%c7, %c0_9] : memref<9x256xf32, #tpu.memory_space<vmem>>, vector<1x256xf32>
    %30 = vector.broadcast %29 : vector<1x256xf32> to vector<8x256xf32>
    %31 = arith.mulf %28, %30 : vector<8x256xf32>
    %c239_i32 = arith.constant 239 : i32
    %32 = tpu.dynamic_rotate %3 by %c239_i32 dim 1 : vector<8x256xf32>, i32 -> vector<8x256xf32>
    %c8 = arith.constant 8 : index
    %c0_10 = arith.constant 0 : index
    %33 = vector.load %arg0[%c8, %c0_10] : memref<9x256xf32, #tpu.memory_space<vmem>>, vector<1x256xf32>
    %34 = vector.broadcast %33 : vector<1x256xf32> to vector<8x256xf32>
    %35 = arith.mulf %32, %34 : vector<8x256xf32>
    %36 = tpu.concatenate %7, %11, %15, %19, %3, %23, %27, %31, %35, %1 in 0 : vector<8x256xf32>, vector<8x256xf32>, vector<8x256xf32>, vector<8x256xf32>, vector<8x256xf32>, vector<8x256xf32>, vector<8x256xf32>, vector<8x256xf32>, vector<8x256xf32>, vector<1x256xf32> -> vector<73x256xf32>
    %c0_11 = arith.constant 0 : index
    %c0_12 = arith.constant 0 : index
    %37 = vector.load %arg2[%c0_11, %c0_12] : memref<8x73xf32, #tpu.memory_space<vmem>>, vector<8x73xf32>
    %cst_13 = arith.constant dense<0.000000e+00> : vector<8x256xf32>
    %38 = tpu.matmul %37, %36, %cst_13 {dimension_numbers = #tpu.dot_dimension_numbers<[1], [0], [0], [1], [0, 0, 1, 1], [], []>} : vector<8x73xf32>, vector<73x256xf32>, vector<8x256xf32> -> vector<8x256xf32>
    %cst_14 = arith.constant 0.000000e+00 : f32
    %39 = vector.broadcast %cst_14 : f32 to vector<8x256xf32>
    %40 = arith.maximumf %38, %39 : vector<8x256xf32>
    %c17_i32_15 = arith.constant 17 : i32
    %41 = tpu.dynamic_rotate %40 by %c17_i32_15 dim 1 : vector<8x256xf32>, i32 -> vector<8x256xf32>
    %c0_16 = arith.constant 0 : index
    %c0_17 = arith.constant 0 : index
    %42 = vector.load %arg0[%c0_16, %c0_17] : memref<9x256xf32, #tpu.memory_space<vmem>>, vector<1x256xf32>
    %43 = vector.broadcast %42 : vector<1x256xf32> to vector<8x256xf32>
    %44 = arith.mulf %41, %43 : vector<8x256xf32>
    %c16_i32_18 = arith.constant 16 : i32
    %45 = tpu.dynamic_rotate %40 by %c16_i32_18 dim 1 : vector<8x256xf32>, i32 -> vector<8x256xf32>
    %c1_19 = arith.constant 1 : index
    %c0_20 = arith.constant 0 : index
    %46 = vector.load %arg0[%c1_19, %c0_20] : memref<9x256xf32, #tpu.memory_space<vmem>>, vector<1x256xf32>
    %47 = vector.broadcast %46 : vector<1x256xf32> to vector<8x256xf32>
    %48 = arith.mulf %45, %47 : vector<8x256xf32>
    %c15_i32_21 = arith.constant 15 : i32
    %49 = tpu.dynamic_rotate %40 by %c15_i32_21 dim 1 : vector<8x256xf32>, i32 -> vector<8x256xf32>
    %c2_22 = arith.constant 2 : index
    %c0_23 = arith.constant 0 : index
    %50 = vector.load %arg0[%c2_22, %c0_23] : memref<9x256xf32, #tpu.memory_space<vmem>>, vector<1x256xf32>
    %51 = vector.broadcast %50 : vector<1x256xf32> to vector<8x256xf32>
    %52 = arith.mulf %49, %51 : vector<8x256xf32>
    %c1_i32_24 = arith.constant 1 : i32
    %53 = tpu.dynamic_rotate %40 by %c1_i32_24 dim 1 : vector<8x256xf32>, i32 -> vector<8x256xf32>
    %c3_25 = arith.constant 3 : index
    %c0_26 = arith.constant 0 : index
    %54 = vector.load %arg0[%c3_25, %c0_26] : memref<9x256xf32, #tpu.memory_space<vmem>>, vector<1x256xf32>
    %55 = vector.broadcast %54 : vector<1x256xf32> to vector<8x256xf32>
    %56 = arith.mulf %53, %55 : vector<8x256xf32>
    %c255_i32_27 = arith.constant 255 : i32
    %57 = tpu.dynamic_rotate %40 by %c255_i32_27 dim 1 : vector<8x256xf32>, i32 -> vector<8x256xf32>
    %c5_28 = arith.constant 5 : index
    %c0_29 = arith.constant 0 : index
    %58 = vector.load %arg0[%c5_28, %c0_29] : memref<9x256xf32, #tpu.memory_space<vmem>>, vector<1x256xf32>
    %59 = vector.broadcast %58 : vector<1x256xf32> to vector<8x256xf32>
    %60 = arith.mulf %57, %59 : vector<8x256xf32>
    %c241_i32_30 = arith.constant 241 : i32
    %61 = tpu.dynamic_rotate %40 by %c241_i32_30 dim 1 : vector<8x256xf32>, i32 -> vector<8x256xf32>
    %c6_31 = arith.constant 6 : index
    %c0_32 = arith.constant 0 : index
    %62 = vector.load %arg0[%c6_31, %c0_32] : memref<9x256xf32, #tpu.memory_space<vmem>>, vector<1x256xf32>
    %63 = vector.broadcast %62 : vector<1x256xf32> to vector<8x256xf32>
    %64 = arith.mulf %61, %63 : vector<8x256xf32>
    %c240_i32_33 = arith.constant 240 : i32
    %65 = tpu.dynamic_rotate %40 by %c240_i32_33 dim 1 : vector<8x256xf32>, i32 -> vector<8x256xf32>
    %c7_34 = arith.constant 7 : index
    %c0_35 = arith.constant 0 : index
    %66 = vector.load %arg0[%c7_34, %c0_35] : memref<9x256xf32, #tpu.memory_space<vmem>>, vector<1x256xf32>
    %67 = vector.broadcast %66 : vector<1x256xf32> to vector<8x256xf32>
    %68 = arith.mulf %65, %67 : vector<8x256xf32>
    %c239_i32_36 = arith.constant 239 : i32
    %69 = tpu.dynamic_rotate %40 by %c239_i32_36 dim 1 : vector<8x256xf32>, i32 -> vector<8x256xf32>
    %c8_37 = arith.constant 8 : index
    %c0_38 = arith.constant 0 : index
    %70 = vector.load %arg0[%c8_37, %c0_38] : memref<9x256xf32, #tpu.memory_space<vmem>>, vector<1x256xf32>
    %71 = vector.broadcast %70 : vector<1x256xf32> to vector<8x256xf32>
    %72 = arith.mulf %69, %71 : vector<8x256xf32>
    %73 = tpu.concatenate %44, %48, %52, %56, %40, %60, %64, %68, %72, %1 in 0 : vector<8x256xf32>, vector<8x256xf32>, vector<8x256xf32>, vector<8x256xf32>, vector<8x256xf32>, vector<8x256xf32>, vector<8x256xf32>, vector<8x256xf32>, vector<8x256xf32>, vector<1x256xf32> -> vector<73x256xf32>
    %c0_39 = arith.constant 0 : index
    %c0_40 = arith.constant 0 : index
    %74 = vector.load %arg3[%c0_39, %c0_40] : memref<8x73xf32, #tpu.memory_space<vmem>>, vector<8x73xf32>
    %cst_41 = arith.constant dense<0.000000e+00> : vector<8x256xf32>
    %75 = tpu.matmul %74, %73, %cst_41 {dimension_numbers = #tpu.dot_dimension_numbers<[1], [0], [0], [1], [0, 0, 1, 1], [], []>} : vector<8x73xf32>, vector<73x256xf32>, vector<8x256xf32> -> vector<8x256xf32>
    %76 = arith.addf %75, %0 : vector<8x256xf32>
    %c0_42 = arith.constant 0 : index
    %c0_43 = arith.constant 0 : index
    %77 = vector.load %arg4[%c0_42, %c0_43] : memref<8x256xf32, #tpu.memory_space<vmem>>, vector<8x256xf32>
    tpu.vector_store %arg4[%c0_42, %c0_43], %76 {strides = array<i32>} : memref<8x256xf32, #tpu.memory_space<vmem>>, vector<8x256xf32>,
    return
  }
}

</mosaic_0001>

<llo_original>
// kernel: tpu_custom_call.1
$region0: #{tpu_custom_call.1}
  #allocation0 [shape = 'u32[]', space=smem, size = 0x4, offset = 0x4, fixed_abs, tag = 'smem constant byte address 0x4 - core index']
  #allocation1 [shape = 'u32[144,128]{1,0:T(1,128)}', space=vmem, size = 0x12000, scoped, tag = 'internal scratch']
  %s0 = inlined_call_operand.hbm [shape: f32[9,256], index: 0, kind: input, shape index: {}]
  %s1 = inlined_call_operand.hbm [shape: f32[8,256], index: 1, kind: input, shape index: {}]
  %s2 = inlined_call_operand.hbm [shape: f32[8,73], index: 2, kind: input, shape index: {}]
  %s3 = inlined_call_operand.vmem [shape: f32[8,73], index: 3, kind: input, shape index: {}]
  %s4 = inlined_call_operand.hbm [shape: f32[8,256], index: 4, kind: output, shape index: {}]
  %s5 = sld [smem:[#allocation0]]
  $region38: #{tpu_custom_call.1} parent=0
    _
  %s7 = ssub.s32 1, %s5
  %s8 = scalar_select 0, %s7, %s5
  $region1: #{tpu_custom_call.1} parent=0
    #allocation2 [shape = 'u8[16384]{0}', space=vmem, size = 0x4000, scoped, tag = 'input window, operand 0, single buffered']
    #allocation3 [shape = 's32[1]{0}', space=sflag, size = 0x4, scoped, tag = 'scoped memory for tpu_custom_call.1']
    #allocation4 [shape = 's32[1]{0}', space=sflag, size = 0x4, scoped, tag = 'scoped memory for tpu_custom_call.1']
    #allocation5 [shape = 'u8[8192]{0}', space=vmem, size = 0x2000, scoped, tag = 'input window, operand 1, single buffered']
    #allocation6 [shape = 's32[1]{0}', space=sflag, size = 0x4, scoped, tag = 'scoped memory for tpu_custom_call.1']
    #allocation7 [shape = 'u8[4096]{0}', space=vmem, size = 0x1000, scoped, tag = 'input window, operand 2, single buffered']
    #allocation8 [shape = 'u8[8192]{0}', space=vmem, size = 0x2000, scoped, tag = 'output window, operand 0, single buffered']
    %9 = vsyncpa [#allocation3], 0
    %10 = vsyncpa [#allocation6], 0
    %11 = vsyncpa [#allocation4], 0
    // Predicated region
    $region2: #{tpu_custom_call.1} parent=1 // pred_check
      _
    $region3: #{tpu_custom_call.1} parent=1 // pred_check_branch
      %13 = sbr.rel (0) target = $region5
    $region4: #{tpu_custom_call.1} parent=1 // pred_region
      %s15 = ssub.s32 512, 512
      %16 = vsyncadd [#allocation3], %s15
      %s17 = sshll.u32 [#allocation2], 4
      %s18 = int_to_ptr.vmem [resolvable:$true] %s17
      %23 = dma.hbm_to_vmem [thread:$0]  %s0, 512, %s18, [#allocation3], 256, 256, 16
    $region5: #{tpu_custom_call.1} parent=1 // pred_fallthru
      _
    // Predicated region
    $region6: #{tpu_custom_call.1} parent=1 // pred_check
      _
    $region7: #{tpu_custom_call.1} parent=1 // pred_check_branch
      %25 = sbr.rel (0) target = $region9
    $region8: #{tpu_custom_call.1} parent=1 // pred_region
      %s27 = ssub.s32 256, 256
      %28 = vsyncadd [#allocation6], %s27
      %s30 = sshll.u32 [#allocation5], 4
      %s31 = int_to_ptr.vmem [resolvable:$true] %s30
      %33 = dma.hbm_to_vmem [thread:$0]  %s1, 256, %s31, [#allocation6]
    $region9: #{tpu_custom_call.1} parent=1 // pred_fallthru
      _
    // Predicated region
    $region10: #{tpu_custom_call.1} parent=1 // pred_check
      _
    $region11: #{tpu_custom_call.1} parent=1 // pred_check_branch
      %35 = sbr.rel (0) target = $region13
    $region12: #{tpu_custom_call.1} parent=1 // pred_region
      %s37 = ssub.s32 128, 128
      %38 = vsyncadd [#allocation6], %s37
      %s40 = sshll.u32 [#allocation7], 4
      %s41 = int_to_ptr.vmem [resolvable:$true] %s40
      %43 = dma.hbm_to_vmem [thread:$0]  %s2, 128, %s41, [#allocation6]
    $region13: #{tpu_custom_call.1} parent=1 // pred_fallthru
      _
    // Predicated region
    $region14: #{tpu_custom_call.1} parent=1 // pred_check
      _
    $region15: #{tpu_custom_call.1} parent=1 // pred_check_branch
      %45 = sbr.rel (0) target = $region17
    $region16: #{tpu_custom_call.1} parent=1 // pred_region
      _
    $region17: #{tpu_custom_call.1} parent=1 // pred_fallthru
      _
    // Predicated region
    $region18: #{tpu_custom_call.1} parent=1 // pred_check
      _
    $region19: #{tpu_custom_call.1} parent=1 // pred_check_branch
      %47 = sbr.rel (0) target = $region21
    $region20: #{tpu_custom_call.1} parent=1 // pred_region
      %48 = dma.done [#allocation3], 512
    $region21: #{tpu_custom_call.1} parent=1 // pred_fallthru
      _
    // Predicated region
    $region22: #{tpu_custom_call.1} parent=1 // pred_check
      _
    $region23: #{tpu_custom_call.1} parent=1 // pred_check_branch
      %50 = sbr.rel (0) target = $region25
    $region24: #{tpu_custom_call.1} parent=1 // pred_region
      %51 = dma.done [#allocation6], 256
    $region25: #{tpu_custom_call.1} parent=1 // pred_fallthru
      _
    // Predicated region
    $region26: #{tpu_custom_call.1} parent=1 // pred_check
      _
    $region27: #{tpu_custom_call.1} parent=1 // pred_check_branch
      %53 = sbr.rel (0) target = $region29
    $region28: #{tpu_custom_call.1} parent=1 // pred_region
      %54 = dma.done [#allocation6], 128
    $region29: #{tpu_custom_call.1} parent=1 // pred_fallthru
      _
    %v55 = vld [vmem:[#allocation5] sm:$0xff]
    %v56 = vld [vmem:[#allocation5 + $0x8] sm:$0xff]
    %v57 = vmax.f32 %v55, 0.0
    %v58 = vmax.f32 %v56, 0.0
    %59 = vrot.lane.b32.xlu0 %v57, 17
    %v60 = vpop.permute.xlu0 %59
    %61 = vrot.lane.b32.xlu0 %v58, 17
    %v62 = vpop.permute.xlu0 %61
    %v63 = vlaneseq
    %v64 = vand.u32 %v63, 127
    %vm65 = vcmp.lt.s32.totalorder %v64, 17
    %v66 = vsel %vm65, %v60, %v62
    %v67 = vsel %vm65, %v62, %v60
    %v68 = vld [vmem:[#allocation2] ss:$8 sm:$0x3]
    %v70 = vlaneseq
    %v71 = vshrl.u32 %v70, 7
    %v72 = vsub.s32 0, %v71
    %v73 = vrot.slane %v68, %v72
    %v74 = vlaneseq
    %v75 = vshrl.u32 %v74, 7
    %v76 = vsub.s32 1, %v75
    %v77 = vrot.slane %v68, %v76
    %v80 = vmul.f32 %v67, %v73
    %v81 = vmul.f32 %v66, %v77
    %82 = vrot.lane.b32.xlu0 %v57, 16
    %v83 = vpop.permute.xlu0 %82
    %84 = vrot.lane.b32.xlu0 %v58, 16
    %v85 = vpop.permute.xlu0 %84
    %vm86 = vcmp.lt.s32.totalorder %v64, 16
    %v87 = vsel %vm86, %v83, %v85
    %v88 = vsel %vm86, %v85, %v83
    %s89 = scalar_lea.vmem [#allocation2], 1
    %v90 = vld [vmem:[%s89] ss:$8 sm:$0x3]
    %v92 = vlaneseq
    %v93 = vshrl.u32 %v92, 7
    %v94 = vsub.s32 0, %v93
    %v95 = vrot.slane %v90, %v94
    %v96 = vlaneseq
    %v97 = vshrl.u32 %v96, 7
    %v98 = vsub.s32 1, %v97
    %v99 = vrot.slane %v90, %v98
    %v102 = vmul.f32 %v88, %v95
    %v103 = vmul.f32 %v87, %v99
    %104 = vrot.lane.b32.xlu0 %v57, 15
    %v105 = vpop.permute.xlu0 %104
    %106 = vrot.lane.b32.xlu0 %v58, 15
    %v107 = vpop.permute.xlu0 %106
    %vm108 = vcmp.lt.s32.totalorder %v64, 15
    %v109 = vsel %vm108, %v105, %v107
    %v110 = vsel %vm108, %v107, %v105
    %s111 = scalar_lea.vmem [#allocation2], 2
    %v112 = vld [vmem:[%s111] ss:$8 sm:$0x3]
    %v114 = vlaneseq
    %v115 = vshrl.u32 %v114, 7
    %v116 = vsub.s32 0, %v115
    %v117 = vrot.slane %v112, %v116
    %v118 = vlaneseq
    %v119 = vshrl.u32 %v118, 7
    %v120 = vsub.s32 1, %v119
    %v121 = vrot.slane %v112, %v120
    %v124 = vmul.f32 %v110, %v117
    %v125 = vmul.f32 %v109, %v121
    %126 = vrot.lane.b32.xlu0 %v57, 1
    %v127 = vpop.permute.xlu0 %126
    %128 = vrot.lane.b32.xlu0 %v58, 1
    %v129 = vpop.permute.xlu0 %128
    %vm130 = vcmp.lt.s32.totalorder %v64, 1
    %v131 = vsel %vm130, %v127, %v129
    %v132 = vsel %vm130, %v129, %v127
    %s133 = scalar_lea.vmem [#allocation2], 3
    %v134 = vld [vmem:[%s133] ss:$8 sm:$0x3]
    %v136 = vlaneseq
    %v137 = vshrl.u32 %v136, 7
    %v138 = vsub.s32 0, %v137
    %v139 = vrot.slane %v134, %v138
    %v140 = vlaneseq
    %v141 = vshrl.u32 %v140, 7
    %v142 = vsub.s32 1, %v141
    %v143 = vrot.slane %v134, %v142
    %v146 = vmul.f32 %v132, %v139
    %v147 = vmul.f32 %v131, %v143
    %148 = vrot.lane.b32.xlu0 %v57, 127
    %v149 = vpop.permute.xlu0 %148
    %150 = vrot.lane.b32.xlu0 %v58, 127
    %v151 = vpop.permute.xlu0 %150
    %vm152 = vcmp.lt.s32.totalorder %v64, 127
    %v153 = vsel %vm152, %v149, %v151
    %v154 = vsel %vm152, %v151, %v149
    %s155 = scalar_lea.vmem [#allocation2], 5
    %v156 = vld [vmem:[%s155] ss:$8 sm:$0x3]
    %v158 = vlaneseq
    %v159 = vshrl.u32 %v158, 7
    %v160 = vsub.s32 0, %v159
    %v161 = vrot.slane %v156, %v160
    %v162 = vlaneseq
    %v163 = vshrl.u32 %v162, 7
    %v164 = vsub.s32 1, %v163
    %v165 = vrot.slane %v156, %v164
    %v168 = vmul.f32 %v153, %v161
    %v169 = vmul.f32 %v154, %v165
    %170 = vrot.lane.b32.xlu0 %v57, 113
    %v171 = vpop.permute.xlu0 %170
    %172 = vrot.lane.b32.xlu0 %v58, 113
    %v173 = vpop.permute.xlu0 %172
    %vm174 = vcmp.lt.s32.totalorder %v64, 113
    %v175 = vsel %vm174, %v171, %v173
    %v176 = vsel %vm174, %v173, %v171
    %s177 = scalar_lea.vmem [#allocation2], 6
    %v178 = vld [vmem:[%s177] ss:$8 sm:$0x3]
    %v180 = vlaneseq
    %v181 = vshrl.u32 %v180, 7
    %v182 = vsub.s32 0, %v181
    %v183 = vrot.slane %v178, %v182
    %v184 = vlaneseq
    %v185 = vshrl.u32 %v184, 7
    %v186 = vsub.s32 1, %v185
    %v187 = vrot.slane %v178, %v186
    %v190 = vmul.f32 %v175, %v183
    %v191 = vmul.f32 %v176, %v187
    %192 = vrot.lane.b32.xlu0 %v57, 112
    %v193 = vpop.permute.xlu0 %192
    %194 = vrot.lane.b32.xlu0 %v58, 112
    %v195 = vpop.permute.xlu0 %194
    %vm196 = vcmp.lt.s32.totalorder %v64, 112
    %v197 = vsel %vm196, %v193, %v195
    %v198 = vsel %vm196, %v195, %v193
    %s199 = scalar_lea.vmem [#allocation2], 7
    %v200 = vld [vmem:[%s199] ss:$8 sm:$0x3]
    %v202 = vlaneseq
    %v203 = vshrl.u32 %v202, 7
    %v204 = vsub.s32 0, %v203
    %v205 = vrot.slane %v200, %v204
    %v206 = vlaneseq
    %v207 = vshrl.u32 %v206, 7
    %v208 = vsub.s32 1, %v207
    %v209 = vrot.slane %v200, %v208
    %v212 = vmul.f32 %v197, %v205
    %v213 = vmul.f32 %v198, %v209
    %214 = vrot.lane.b32.xlu0 %v57, 111
    %v215 = vpop.permute.xlu0 %214
    %216 = vrot.lane.b32.xlu0 %v58, 111
    %v217 = vpop.permute.xlu0 %216
    %vm218 = vcmp.lt.s32.totalorder %v64, 111
    %v219 = vsel %vm218, %v215, %v217
    %v220 = vsel %vm218, %v217, %v215
    %s221 = scalar_lea.vmem [#allocation2], 16
    %v222 = vld [vmem:[%s221] ss:$8 sm:$0x3]
    %v224 = vlaneseq
    %v225 = vshrl.u32 %v224, 7
    %v226 = vsub.s32 0, %v225
    %v227 = vrot.slane %v222, %v226
    %v228 = vlaneseq
    %v229 = vshrl.u32 %v228, 7
    %v230 = vsub.s32 1, %v229
    %v231 = vrot.slane %v222, %v230
    %v234 = vmul.f32 %v219, %v227
    %v235 = vmul.f32 %v220, %v231
    %v236 = vld [vmem:[#allocation7] sm:$0xff]
    %vm237 = vcmask 596992
    %v239 = vsel %vm237, %v236, 0
    %vm241 = vcmask 1040384
    %v243 = vsel %vm241, 1.0, 0
    %245 = vmatprep.subr.mxu0 %v81
    %246 = vmatpush1.msra.mxu0 %v80
    %247 = vmatprep.subr.mxu0 %v103
    %248 = vmatpush1.msra.mxu0 %v102
    %249 = vmatprep.subr.mxu0 %v125
    %250 = vmatpush1.msra.mxu0 %v124
    %251 = vmatprep.subr.mxu0 %v147
    %252 = vmatpush1.msra.mxu0 %v146
    %253 = vmatprep.subr.mxu0 %v58
    %254 = vmatpush1.msra.mxu0 %v57
    %255 = vmatprep.subr.mxu0 %v169
    %256 = vmatpush1.msra.mxu0 %v168
    %257 = vmatprep.subr.mxu0 %v191
    %258 = vmatpush1.msra.mxu0 %v190
    %259 = vmatprep.subr.mxu0 %v213
    %260 = vmatpush1.msra.mxu0 %v212
    %261 = vmatprep.subr.mxu0 %v235
    %262 = vmatpush1.msra.mxu0 %v234
    %263 = vmatprep.subr.mxu0 %v243
    %264 = vmatpush1.msra.mxu0 %v243
    %265 = vmatprep.subr.mxu0 0.0
    %266 = vmatpush1.msra.mxu0 0.0
    %267 = vmatprep.subr.mxu0 0.0
    %268 = vmatpush1.msra.mxu0 0.0
    %269 = vmatprep.subr.mxu0 0.0
    %270 = vmatpush1.msra.mxu0 0.0
    %271 = vmatprep.subr.mxu0 0.0
    %272 = vmatpush1.msra.mxu0 0.0
    %273 = vmatprep.subr.mxu0 0.0
    %274 = vmatpush1.msra.mxu0 0.0
    %275 = vmatprep.subr.mxu0 0.0
    %276 = vmatpush1.msra.mxu0 0.0
    %277 = vmatprep.subr.mxu0 0.0
    %278 = vmatpush1.msra.mxu0 0.0
    %279 = vmatprep.subr.mxu0 0.0
    %280 = vmatpush1.msra.mxu0 0.0
    %281 = vmatprep.subr.mxu0 0.0
    %282 = vmatpush1.msra.mxu0 0.0
    %283 = vmatprep.subr.mxu0 0.0
    %284 = vmatpush1.msra.mxu0 0.0
    %285 = vmatprep.subr.mxu0 0.0
    %286 = vmatpush1.msra.mxu0 0.0
    %287 = vmatprep.subr.mxu0 0.0
    %288 = vmatpush1.msra.mxu0 0.0
    %289 = vmatprep.subr.mxu0 0.0
    %290 = vmatpush1.msra.mxu0 0.0
    %291 = vmatprep.subr.mxu0 0.0
    %292 = vmatpush1.msra.mxu0 0.0
    %293 = vmatprep.subr.mxu0 0.0
    %294 = vmatpush1.msra.mxu0 0.0
    %295 = vmatprep.subr.mxu0 0.0
    %296 = vmatpush1.msra.mxu0 0.0
    %297 = vmatprep.subr.mxu0 0.0
    %298 = vmatpush1.msra.mxu0 0.0
    %299 = vmatprep.subr.mxu0 0.0
    %300 = vmatpush1.msra.mxu0 0.0
    %301 = vmatprep.subr.mxu0 0.0
    %302 = vmatpush1.msra.mxu0 0.0
    %303 = vmatprep.subr.mxu0 0.0
    %304 = vmatpush1.msra.mxu0 0.0
    %305 = vmatprep.subr.mxu0 0.0
    %306 = vmatpush1.msra.mxu0 0.0
    %307 = vmatprep.subr.mxu0 0.0
    %308 = vmatpush1.msra.mxu0 0.0
    %309 = vmatprep.mubr.f32.mxu0 0.0
    %310 = vmatmul.mubr.f32.gmra.mrb[0].mxu0 %v239
    %v311 = vpop.f32.mrb[0].mxu0
    %v312 = vadd.f32 0.0, %v311
    %v313 = vpop.f32.mrb[0].mxu0
    %v314 = vadd.f32 0.0, %v313
    %315 = vdwg.mxu0
    %v316 = vmax.f32 %v312, 0.0
    %v317 = vmax.f32 %v314, 0.0
    %318 = vrot.lane.b32.xlu0 %v316, 17
    %v319 = vpop.permute.xlu0 %318
    %320 = vrot.lane.b32.xlu0 %v317, 17
    %v321 = vpop.permute.xlu0 %320
    %v322 = vsel %vm65, %v319, %v321
    %v323 = vsel %vm65, %v321, %v319
    %v324 = vmul.f32 %v323, %v73
    %v325 = vmul.f32 %v322, %v77
    %326 = vrot.lane.b32.xlu0 %v316, 16
    %v327 = vpop.permute.xlu0 %326
    %328 = vrot.lane.b32.xlu0 %v317, 16
    %v329 = vpop.permute.xlu0 %328
    %v330 = vsel %vm86, %v327, %v329
    %v331 = vsel %vm86, %v329, %v327
    %v332 = vmul.f32 %v331, %v95
    %v333 = vmul.f32 %v330, %v99
    %334 = vrot.lane.b32.xlu0 %v316, 15
    %v335 = vpop.permute.xlu0 %334
    %336 = vrot.lane.b32.xlu0 %v317, 15
    %v337 = vpop.permute.xlu0 %336
    %v338 = vsel %vm108, %v335, %v337
    %v339 = vsel %vm108, %v337, %v335
    %v340 = vmul.f32 %v339, %v117
    %v341 = vmul.f32 %v338, %v121
    %342 = vrot.lane.b32.xlu0 %v316, 1
    %v343 = vpop.permute.xlu0 %342
    %344 = vrot.lane.b32.xlu0 %v317, 1
    %v345 = vpop.permute.xlu0 %344
    %v346 = vsel %vm130, %v343, %v345
    %v347 = vsel %vm130, %v345, %v343
    %v348 = vmul.f32 %v347, %v139
    %v349 = vmul.f32 %v346, %v143
    %350 = vrot.lane.b32.xlu0 %v316, 127
    %v351 = vpop.permute.xlu0 %350
    %352 = vrot.lane.b32.xlu0 %v317, 127
    %v353 = vpop.permute.xlu0 %352
    %v354 = vsel %vm152, %v351, %v353
    %v355 = vsel %vm152, %v353, %v351
    %v356 = vmul.f32 %v354, %v161
    %v357 = vmul.f32 %v355, %v165
    %358 = vrot.lane.b32.xlu0 %v316, 113
    %v359 = vpop.permute.xlu0 %358
    %360 = vrot.lane.b32.xlu0 %v317, 113
    %v361 = vpop.permute.xlu0 %360
    %v362 = vsel %vm174, %v359, %v361
    %v363 = vsel %vm174, %v361, %v359
    %v364 = vmul.f32 %v362, %v183
    %v365 = vmul.f32 %v363, %v187
    %366 = vrot.lane.b32.xlu0 %v316, 112
    %v367 = vpop.permute.xlu0 %366
    %368 = vrot.lane.b32.xlu0 %v317, 112
    %v369 = vpop.permute.xlu0 %368
    %v370 = vsel %vm196, %v367, %v369
    %v371 = vsel %vm196, %v369, %v367
    %v372 = vmul.f32 %v370, %v205
    %v373 = vmul.f32 %v371, %v209
    %374 = vrot.lane.b32.xlu0 %v316, 111
    %v375 = vpop.permute.xlu0 %374
    %376 = vrot.lane.b32.xlu0 %v317, 111
    %v377 = vpop.permute.xlu0 %376
    %v378 = vsel %vm218, %v375, %v377
    %v379 = vsel %vm218, %v377, %v375
    %v380 = vmul.f32 %v378, %v227
    %v381 = vmul.f32 %v379, %v231
    %v382 = vld [vmem:[%s3] sm:$0xff]
    %v384 = vsel %vm237, %v382, 0
    %386 = vmatprep.subr.mxu0 %v325
    %387 = vmatpush1.msra.mxu0 %v324
    %388 = vmatprep.subr.mxu0 %v333
    %389 = vmatpush1.msra.mxu0 %v332
    %390 = vmatprep.subr.mxu0 %v341
    %391 = vmatpush1.msra.mxu0 %v340
    %392 = vmatprep.subr.mxu0 %v349
    %393 = vmatpush1.msra.mxu0 %v348
    %394 = vmatprep.subr.mxu0 %v317
    %395 = vmatpush1.msra.mxu0 %v316
    %396 = vmatprep.subr.mxu0 %v357
    %397 = vmatpush1.msra.mxu0 %v356
    %398 = vmatprep.subr.mxu0 %v365
    %399 = vmatpush1.msra.mxu0 %v364
    %400 = vmatprep.subr.mxu0 %v373
    %401 = vmatpush1.msra.mxu0 %v372
    %402 = vmatprep.subr.mxu0 %v381
    %403 = vmatpush1.msra.mxu0 %v380
    %404 = vmatprep.subr.mxu0 %v243
    %405 = vmatpush1.msra.mxu0 %v243
    %406 = vmatprep.subr.mxu0 0.0
    %407 = vmatpush1.msra.mxu0 0.0
    %408 = vmatprep.subr.mxu0 0.0
    %409 = vmatpush1.msra.mxu0 0.0
    %410 = vmatprep.subr.mxu0 0.0
    %411 = vmatpush1.msra.mxu0 0.0
    %412 = vmatprep.subr.mxu0 0.0
    %413 = vmatpush1.msra.mxu0 0.0
    %414 = vmatprep.subr.mxu0 0.0
    %415 = vmatpush1.msra.mxu0 0.0
    %416 = vmatprep.subr.mxu0 0.0
    %417 = vmatpush1.msra.mxu0 0.0
    %418 = vmatprep.subr.mxu0 0.0
    %419 = vmatpush1.msra.mxu0 0.0
    %420 = vmatprep.subr.mxu0 0.0
    %421 = vmatpush1.msra.mxu0 0.0
    %422 = vmatprep.subr.mxu0 0.0
    %423 = vmatpush1.msra.mxu0 0.0
    %424 = vmatprep.subr.mxu0 0.0
    %425 = vmatpush1.msra.mxu0 0.0
    %426 = vmatprep.subr.mxu0 0.0
    %427 = vmatpush1.msra.mxu0 0.0
    %428 = vmatprep.subr.mxu0 0.0
    %429 = vmatpush1.msra.mxu0 0.0
    %430 = vmatprep.subr.mxu0 0.0
    %431 = vmatpush1.msra.mxu0 0.0
    %432 = vmatprep.subr.mxu0 0.0
    %433 = vmatpush1.msra.mxu0 0.0
    %434 = vmatprep.subr.mxu0 0.0
    %435 = vmatpush1.msra.mxu0 0.0
    %436 = vmatprep.subr.mxu0 0.0
    %437 = vmatpush1.msra.mxu0 0.0
    %438 = vmatprep.subr.mxu0 0.0
    %439 = vmatpush1.msra.mxu0 0.0
    %440 = vmatprep.subr.mxu0 0.0
    %441 = vmatpush1.msra.mxu0 0.0
    %442 = vmatprep.subr.mxu0 0.0
    %443 = vmatpush1.msra.mxu0 0.0
    %444 = vmatprep.subr.mxu0 0.0
    %445 = vmatpush1.msra.mxu0 0.0
    %446 = vmatprep.subr.mxu0 0.0
    %447 = vmatpush1.msra.mxu0 0.0
    %448 = vmatprep.subr.mxu0 0.0
    %449 = vmatpush1.msra.mxu0 0.0
    %450 = vmatprep.mubr.f32.mxu0 0.0
    %451 = vmatmul.mubr.f32.gmra.mrb[0].mxu0 %v384
    %v452 = vpop.f32.mrb[0].mxu0
    %v453 = vadd.f32 %v55, %v452
    %v454 = vpop.f32.mrb[0].mxu0
    %v455 = vadd.f32 %v56, %v454
    %456 = vdwg.mxu0
    %457 = vst [vmem:[#allocation8] sm:$0xff] %v453
    %458 = vst [vmem:[#allocation8 + $0x8] sm:$0xff] %v455
    // Predicated region
    $region30: #{tpu_custom_call.1} parent=1 // pred_check
      _
    $region31: #{tpu_custom_call.1} parent=1 // pred_check_branch
      %460 = sbr.rel (0) target = $region33
    $region32: #{tpu_custom_call.1} parent=1 // pred_region
      %s462 = ssub.s32 256, 256
      %463 = vsyncadd [#allocation4], %s462
      %s465 = sshll.u32 [#allocation8], 4
      %s466 = int_to_ptr.vmem [resolvable:$true] %s465
      %468 = dma.vmem_to_hbm [thread:$0]  %s466, 256, %s4, [#allocation4]
    $region33: #{tpu_custom_call.1} parent=1 // pred_fallthru
      _
    // Predicated region
    $region34: #{tpu_custom_call.1} parent=1 // pred_check
      _
    $region35: #{tpu_custom_call.1} parent=1 // pred_check_branch
      %470 = sbr.rel (0) target = $region37
    $region36: #{tpu_custom_call.1} parent=1 // pred_region
      %471 = dma.done [#allocation4], 256
    $region37: #{tpu_custom_call.1} parent=1 // pred_fallthru
      _
    %472 = vsyncpa [#allocation3], 1
    %473 = vsyncpa [#allocation6], 1
    %474 = vsyncpa [#allocation4], 1

</llo_original>
